<compile_context>
chip_gen: v6e
topology: v6e:2x2x1
jax: 0.10.0
libtpu: 0.0.40
codegen_flags: <defaults>
</compile_context>

<pallas_src>
import functools

import jax
import jax.numpy as jnp
from jax.experimental import pallas as pl
from jax.experimental.pallas import tpu as pltpu


def _qnet_kernel(s_ref, a_ref,
                 w1s1_ref, w1a1_ref, b11_ref, w21_ref, b21_ref, w31_ref, b31_ref,
                 w1s2_ref, w1a2_ref, b12_ref, w22_ref, b22_ref, w32_ref, b32_ref,
                 o_ref, *, compute_dtype):
    """Both Q heads: (Linear -> ReLU -> Linear -> ReLU -> Linear) x 2, fused."""
    s = s_ref[...].astype(compute_dtype)
    a = a_ref[...].astype(compute_dtype)

    def head(w1s_ref, w1a_ref, b1_ref, w2_ref, b2_ref, w3_ref, b3_ref):
        # Layer 1:  s @ W1_s + a @ W1_a + b1  ==  concat(s, a) @ W1 + b1
        h = (jnp.dot(s, w1s_ref[...].astype(compute_dtype),
                     preferred_element_type=jnp.float32)
             + jnp.dot(a, w1a_ref[...].astype(compute_dtype),
                       preferred_element_type=jnp.float32)
             + b1_ref[...])
        h = jnp.maximum(h, 0.0)                                    # ReLU (f32, VPU)
        h = jnp.dot(h.astype(compute_dtype), w2_ref[...].astype(compute_dtype),
                    preferred_element_type=jnp.float32) + b2_ref[...]
        h = jnp.maximum(h, 0.0)
        return jnp.dot(h.astype(compute_dtype), w3_ref[...].astype(compute_dtype),
                       preferred_element_type=jnp.float32) + b3_ref[...]   # (TB, 1)

    o_ref[:, 0:1] = head(w1s1_ref, w1a1_ref, b11_ref, w21_ref, b21_ref,
                         w31_ref, b31_ref)
    o_ref[:, 1:2] = head(w1s2_ref, w1a2_ref, b12_ref, w22_ref, b22_ref,
                         w32_ref, b32_ref)


def init_linear_head(key, obs_dim, act_dim, hidden_dim, out_dim=1):
    """Xavier-uniform weights / zero biases matching the PyTorch layer shapes.

    Weights are stored (in, out) so the kernel computes y = x @ W + b; W1 is
    pre-split along its input dim into a state part and an action part.
    """
    def xavier(k, fan_in, fan_out):
        limit = jnp.sqrt(6.0 / (fan_in + fan_out))
        return jax.random.uniform(k, (fan_in, fan_out), jnp.float32, -limit, limit)

    k1, k2, k3 = jax.random.split(key, 3)
    w1 = xavier(k1, obs_dim + act_dim, hidden_dim)
    w1s, w1a = w1[:obs_dim], w1[obs_dim:]
    b1 = jnp.zeros((1, hidden_dim), jnp.float32)
    w2 = xavier(k2, hidden_dim, hidden_dim)
    b2 = jnp.zeros((1, hidden_dim), jnp.float32)
    w3 = xavier(k3, hidden_dim, out_dim)
    b3 = jnp.zeros((1, out_dim), jnp.float32)
    return (w1s, w1a, b1, w2, b2, w3, b3)


def qnetwork_ir_forward(state, action, q1_params, q2_params, *,
                        block_batch=512, compute_dtype=jnp.float32):
    """Equivalent of QNetworkIR.forward: returns (q_1, q_2), each (B, 1)."""
    B, obs_dim = state.shape
    act_dim = action.shape[1]

    # Batch tiling: one grid step per TB rows; weights stay VMEM-resident.
    TB = B if B <= block_batch else block_batch
    n_blocks = pl.cdiv(B, TB)
    B_pad = n_blocks * TB
    if B_pad != B:                       # pad so the grid divides the batch
        state = jnp.pad(state, ((0, B_pad - B), (0, 0)))
        action = jnp.pad(action, ((0, B_pad - B), (0, 0)))

    params = (*q1_params, *q2_params)

    def batch_spec(feat):
        return pl.BlockSpec((TB, feat), lambda i: (i, 0))

    def resident_spec(p):                # full array, constant index map
        return pl.BlockSpec(p.shape, lambda i: (0, 0))

    out = pl.pallas_call(
        functools.partial(_qnet_kernel, compute_dtype=compute_dtype),
        out_shape=jax.ShapeDtypeStruct((B_pad, 2), jnp.float32),
        grid=(n_blocks,),
        in_specs=[batch_spec(obs_dim), batch_spec(act_dim)]
                 + [resident_spec(p) for p in params],
        out_specs=pl.BlockSpec((TB, 2), lambda i: (i, 0)),
        compiler_params=pltpu.CompilerParams(
            dimension_semantics=("parallel",)),   # v7x: shard batch over both TCs
    )(state, action, *params)

    q = out[:B]
    return q[:, 0:1], q[:, 1:2]


def _reference_forward(state, action, q1_params, q2_params):
    """Pure-JAX reference mirroring the PyTorch module (concat then MLP)."""
    def mlp(xu, params):
        w1s, w1a, b1, w2, b2, w3, b3 = params
        w1 = jnp.concatenate([w1s, w1a], axis=0)
        h = jnp.maximum(xu @ w1 + b1, 0.0)
        h = jnp.maximum(h @ w2 + b2, 0.0)
        return h @ w3 + b3
    xu = jnp.concatenate([state, action], axis=-1)
    return mlp(xu, q1_params), mlp(xu, q2_params)


if __name__ == "__main__":
    obs_dim, num_actions, hidden_dim = 12, 4, 32

    key = jax.random.PRNGKey(0)
    k_s, k_a, k_q1, k_q2 = jax.random.split(key, 4)
    q1_params = init_linear_head(k_q1, obs_dim, num_actions, hidden_dim)
    q2_params = init_linear_head(k_q2, obs_dim, num_actions, hidden_dim)

    # Case 1: small single-block batch.
    batch = 8
    state = jax.random.normal(k_s, (batch, obs_dim), jnp.float32)
    action = jax.random.normal(k_a, (batch, num_actions), jnp.float32)
    q1, q2 = qnetwork_ir_forward(state, action, q1_params, q2_params)
    jax.block_until_ready((q1, q2))
    r1, r2 = _reference_forward(state, action, q1_params, q2_params)
    assert q1.shape == (batch, 1) and q2.shape == (batch, 1)
    assert jnp.allclose(q1, r1, atol=1e-5, rtol=1e-4)
    assert jnp.allclose(q2, r2, atol=1e-5, rtol=1e-4)

    # Case 2: multi-block grid (pipelined) with batch padding.
    batch2 = 100
    k_s2, k_a2 = jax.random.split(jax.random.PRNGKey(1))
    state2 = jax.random.normal(k_s2, (batch2, obs_dim), jnp.float32)
    action2 = jax.random.normal(k_a2, (batch2, num_actions), jnp.float32)
    q1b, q2b = qnetwork_ir_forward(state2, action2, q1_params, q2_params,
                                   block_batch=32)
    jax.block_until_ready((q1b, q2b))
    r1b, r2b = _reference_forward(state2, action2, q1_params, q2_params)
    assert q1b.shape == (batch2, 1) and q2b.shape == (batch2, 1)
    assert jnp.allclose(q1b, r1b, atol=1e-5, rtol=1e-4)
    assert jnp.allclose(q2b, r2b, atol=1e-5, rtol=1e-4)

    print("KERNEL_OK")
</pallas_src>

<mosaic_0001>
module attributes {stable_mosaic.version = 11 : i64} {
  func.func @_qnet_kernel(%arg0: i32, %arg1: memref<8x12xf32, #tpu.memory_space<vmem>>, %arg2: memref<8x4xf32, #tpu.memory_space<vmem>>, %arg3: memref<12x32xf32, #tpu.memory_space<vmem>>, %arg4: memref<4x32xf32, #tpu.memory_space<vmem>>, %arg5: memref<1x32xf32, #tpu.memory_space<vmem>>, %arg6: memref<32x32xf32, #tpu.memory_space<vmem>>, %arg7: memref<1x32xf32, #tpu.memory_space<vmem>>, %arg8: memref<32x1xf32, #tpu.memory_space<vmem>>, %arg9: memref<1x1xf32, #tpu.memory_space<vmem>>, %arg10: memref<12x32xf32, #tpu.memory_space<vmem>>, %arg11: memref<4x32xf32, #tpu.memory_space<vmem>>, %arg12: memref<1x32xf32, #tpu.memory_space<vmem>>, %arg13: memref<32x32xf32, #tpu.memory_space<vmem>>, %arg14: memref<1x32xf32, #tpu.memory_space<vmem>>, %arg15: memref<32x1xf32, #tpu.memory_space<vmem>>, %arg16: memref<1x1xf32, #tpu.memory_space<vmem>>, %arg17: memref<8x2xf32, #tpu.memory_space<vmem>>) attributes {dimension_semantics = [#tpu.dimension_semantics<parallel>], iteration_bounds = array<i64: 1>, scalar_prefetch = 0 : i64, scratch_operands = 0 : i64, tpu.core_type = #tpu.core_type<tc>, window_params = [{transform_indices = @transform_0, window_bounds = array<i64: 8, 12>}, {transform_indices = @transform_1, window_bounds = array<i64: 8, 4>}, {pipeline_mode = #tpu.pipeline_mode<synchronous>, transform_indices = @transform_2, window_bounds = array<i64: 12, 32>}, {pipeline_mode = #tpu.pipeline_mode<synchronous>, transform_indices = @transform_3, window_bounds = array<i64: 4, 32>}, {pipeline_mode = #tpu.pipeline_mode<synchronous>, transform_indices = @transform_4, window_bounds = array<i64: 1, 32>}, {pipeline_mode = #tpu.pipeline_mode<synchronous>, transform_indices = @transform_5, window_bounds = array<i64: 32, 32>}, {pipeline_mode = #tpu.pipeline_mode<synchronous>, transform_indices = @transform_6, window_bounds = array<i64: 1, 32>}, {pipeline_mode = #tpu.pipeline_mode<synchronous>, transform_indices = @transform_7, window_bounds = array<i64: 32, 1>}, {pipeline_mode = #tpu.pipeline_mode<synchronous>, transform_indices = @transform_8, window_bounds = array<i64: 1, 1>}, {pipeline_mode = #tpu.pipeline_mode<synchronous>, transform_indices = @transform_9, window_bounds = array<i64: 12, 32>}, {pipeline_mode = #tpu.pipeline_mode<synchronous>, transform_indices = @transform_10, window_bounds = array<i64: 4, 32>}, {pipeline_mode = #tpu.pipeline_mode<synchronous>, transform_indices = @transform_11, window_bounds = array<i64: 1, 32>}, {pipeline_mode = #tpu.pipeline_mode<synchronous>, transform_indices = @transform_12, window_bounds = array<i64: 32, 32>}, {pipeline_mode = #tpu.pipeline_mode<synchronous>, transform_indices = @transform_13, window_bounds = array<i64: 1, 32>}, {pipeline_mode = #tpu.pipeline_mode<synchronous>, transform_indices = @transform_14, window_bounds = array<i64: 32, 1>}, {pipeline_mode = #tpu.pipeline_mode<synchronous>, transform_indices = @transform_15, window_bounds = array<i64: 1, 1>}, {transform_indices = @transform_16, window_bounds = array<i64: 8, 2>}]} {
    %c0 = arith.constant 0 : index
    %c0_0 = arith.constant 0 : index
    %0 = vector.load %arg1[%c0, %c0_0] : memref<8x12xf32, #tpu.memory_space<vmem>>, vector<8x12xf32>
    %c0_1 = arith.constant 0 : index
    %c0_2 = arith.constant 0 : index
    %1 = vector.load %arg2[%c0_1, %c0_2] : memref<8x4xf32, #tpu.memory_space<vmem>>, vector<8x4xf32>
    %c0_3 = arith.constant 0 : index
    %c0_4 = arith.constant 0 : index
    %2 = vector.load %arg3[%c0_3, %c0_4] : memref<12x32xf32, #tpu.memory_space<vmem>>, vector<12x32xf32>
    %cst = arith.constant dense<0.000000e+00> : vector<8x32xf32>
    %3 = tpu.matmul %0, %2, %cst {dimension_numbers = #tpu.dot_dimension_numbers<[1], [0], [0], [1], [0, 0, 1, 1], [], []>} : vector<8x12xf32>, vector<12x32xf32>, vector<8x32xf32> -> vector<8x32xf32>
    %c0_5 = arith.constant 0 : index
    %c0_6 = arith.constant 0 : index
    %4 = vector.load %arg4[%c0_5, %c0_6] : memref<4x32xf32, #tpu.memory_space<vmem>>, vector<4x32xf32>
    %cst_7 = arith.constant dense<0.000000e+00> : vector<8x32xf32>
    %5 = tpu.matmul %1, %4, %cst_7 {dimension_numbers = #tpu.dot_dimension_numbers<[1], [0], [0], [1], [0, 0, 1, 1], [], []>} : vector<8x4xf32>, vector<4x32xf32>, vector<8x32xf32> -> vector<8x32xf32>
    %6 = arith.addf %3, %5 : vector<8x32xf32>
    %c0_8 = arith.constant 0 : index
    %c0_9 = arith.constant 0 : index
    %7 = vector.load %arg5[%c0_8, %c0_9] : memref<1x32xf32, #tpu.memory_space<vmem>>, vector<1x32xf32>
    %8 = vector.broadcast %7 : vector<1x32xf32> to vector<8x32xf32>
    %9 = arith.addf %6, %8 : vector<8x32xf32>
    %cst_10 = arith.constant 0.000000e+00 : f32
    %10 = vector.broadcast %cst_10 : f32 to vector<8x32xf32>
    %11 = arith.maximumf %9, %10 : vector<8x32xf32>
    %c0_11 = arith.constant 0 : index
    %c0_12 = arith.constant 0 : index
    %12 = vector.load %arg6[%c0_11, %c0_12] : memref<32x32xf32, #tpu.memory_space<vmem>>, vector<32x32xf32>
    %cst_13 = arith.constant dense<0.000000e+00> : vector<8x32xf32>
    %13 = tpu.matmul %11, %12, %cst_13 {dimension_numbers = #tpu.dot_dimension_numbers<[1], [0], [0], [1], [0, 0, 1, 1], [], []>} : vector<8x32xf32>, vector<32x32xf32>, vector<8x32xf32> -> vector<8x32xf32>
    %c0_14 = arith.constant 0 : index
    %c0_15 = arith.constant 0 : index
    %14 = vector.load %arg7[%c0_14, %c0_15] : memref<1x32xf32, #tpu.memory_space<vmem>>, vector<1x32xf32>
    %15 = vector.broadcast %14 : vector<1x32xf32> to vector<8x32xf32>
    %16 = arith.addf %13, %15 : vector<8x32xf32>
    %cst_16 = arith.constant 0.000000e+00 : f32
    %17 = vector.broadcast %cst_16 : f32 to vector<8x32xf32>
    %18 = arith.maximumf %16, %17 : vector<8x32xf32>
    %c0_17 = arith.constant 0 : index
    %c0_18 = arith.constant 0 : index
    %19 = vector.load %arg8[%c0_17, %c0_18] : memref<32x1xf32, #tpu.memory_space<vmem>>, vector<32x1xf32>
    %cst_19 = arith.constant dense<0.000000e+00> : vector<8x1xf32>
    %20 = tpu.matmul %18, %19, %cst_19 {dimension_numbers = #tpu.dot_dimension_numbers<[1], [0], [0], [1], [0, 0, 1, 1], [], []>} : vector<8x32xf32>, vector<32x1xf32>, vector<8x1xf32> -> vector<8x1xf32>
    %c0_20 = arith.constant 0 : index
    %c0_21 = arith.constant 0 : index
    %21 = vector.load %arg9[%c0_20, %c0_21] : memref<1x1xf32, #tpu.memory_space<vmem>>, vector<1x1xf32>
    %22 = vector.broadcast %21 : vector<1x1xf32> to vector<8x1xf32>
    %23 = arith.addf %20, %22 : vector<8x1xf32>
    %c0_22 = arith.constant 0 : index
    %c0_23 = arith.constant 0 : index
    %24 = vector.load %arg17[%c0_22, %c0_23] : memref<8x2xf32, #tpu.memory_space<vmem>>, vector<8x1xf32>
    tpu.vector_store %arg17[%c0_22, %c0_23], %23 {strides = array<i32>} : memref<8x2xf32, #tpu.memory_space<vmem>>, vector<8x1xf32>,
    %c0_24 = arith.constant 0 : index
    %c0_25 = arith.constant 0 : index
    %25 = vector.load %arg10[%c0_24, %c0_25] : memref<12x32xf32, #tpu.memory_space<vmem>>, vector<12x32xf32>
    %cst_26 = arith.constant dense<0.000000e+00> : vector<8x32xf32>
    %26 = tpu.matmul %0, %25, %cst_26 {dimension_numbers = #tpu.dot_dimension_numbers<[1], [0], [0], [1], [0, 0, 1, 1], [], []>} : vector<8x12xf32>, vector<12x32xf32>, vector<8x32xf32> -> vector<8x32xf32>
    %c0_27 = arith.constant 0 : index
    %c0_28 = arith.constant 0 : index
    %27 = vector.load %arg11[%c0_27, %c0_28] : memref<4x32xf32, #tpu.memory_space<vmem>>, vector<4x32xf32>
    %cst_29 = arith.constant dense<0.000000e+00> : vector<8x32xf32>
    %28 = tpu.matmul %1, %27, %cst_29 {dimension_numbers = #tpu.dot_dimension_numbers<[1], [0], [0], [1], [0, 0, 1, 1], [], []>} : vector<8x4xf32>, vector<4x32xf32>, vector<8x32xf32> -> vector<8x32xf32>
    %29 = arith.addf %26, %28 : vector<8x32xf32>
    %c0_30 = arith.constant 0 : index
    %c0_31 = arith.constant 0 : index
    %30 = vector.load %arg12[%c0_30, %c0_31] : memref<1x32xf32, #tpu.memory_space<vmem>>, vector<1x32xf32>
    %31 = vector.broadcast %30 : vector<1x32xf32> to vector<8x32xf32>
    %32 = arith.addf %29, %31 : vector<8x32xf32>
    %cst_32 = arith.constant 0.000000e+00 : f32
    %33 = vector.broadcast %cst_32 : f32 to vector<8x32xf32>
    %34 = arith.maximumf %32, %33 : vector<8x32xf32>
    %c0_33 = arith.constant 0 : index
    %c0_34 = arith.constant 0 : index
    %35 = vector.load %arg13[%c0_33, %c0_34] : memref<32x32xf32, #tpu.memory_space<vmem>>, vector<32x32xf32>
    %cst_35 = arith.constant dense<0.000000e+00> : vector<8x32xf32>
    %36 = tpu.matmul %34, %35, %cst_35 {dimension_numbers = #tpu.dot_dimension_numbers<[1], [0], [0], [1], [0, 0, 1, 1], [], []>} : vector<8x32xf32>, vector<32x32xf32>, vector<8x32xf32> -> vector<8x32xf32>
    %c0_36 = arith.constant 0 : index
    %c0_37 = arith.constant 0 : index
    %37 = vector.load %arg14[%c0_36, %c0_37] : memref<1x32xf32, #tpu.memory_space<vmem>>, vector<1x32xf32>
    %38 = vector.broadcast %37 : vector<1x32xf32> to vector<8x32xf32>
    %39 = arith.addf %36, %38 : vector<8x32xf32>
    %cst_38 = arith.constant 0.000000e+00 : f32
    %40 = vector.broadcast %cst_38 : f32 to vector<8x32xf32>
    %41 = arith.maximumf %39, %40 : vector<8x32xf32>
    %c0_39 = arith.constant 0 : index
    %c0_40 = arith.constant 0 : index
    %42 = vector.load %arg15[%c0_39, %c0_40] : memref<32x1xf32, #tpu.memory_space<vmem>>, vector<32x1xf32>
    %cst_41 = arith.constant dense<0.000000e+00> : vector<8x1xf32>
    %43 = tpu.matmul %41, %42, %cst_41 {dimension_numbers = #tpu.dot_dimension_numbers<[1], [0], [0], [1], [0, 0, 1, 1], [], []>} : vector<8x32xf32>, vector<32x1xf32>, vector<8x1xf32> -> vector<8x1xf32>
    %c0_42 = arith.constant 0 : index
    %c0_43 = arith.constant 0 : index
    %44 = vector.load %arg16[%c0_42, %c0_43] : memref<1x1xf32, #tpu.memory_space<vmem>>, vector<1x1xf32>
    %45 = vector.broadcast %44 : vector<1x1xf32> to vector<8x1xf32>
    %46 = arith.addf %43, %45 : vector<8x1xf32>
    %c0_44 = arith.constant 0 : index
    %c1 = arith.constant 1 : index
    %47 = vector.load %arg17[%c0_44, %c1] : memref<8x2xf32, #tpu.memory_space<vmem>>, vector<8x1xf32>
    tpu.vector_store %arg17[%c0_44, %c1], %46 {strides = array<i32>} : memref<8x2xf32, #tpu.memory_space<vmem>>, vector<8x1xf32>,
    return
  }
  func.func @transform_0(%arg0: i32) -> (i32, i32) {
    %c0_i32 = arith.constant 0 : i32
    %c0_i32_0 = arith.constant 0 : i32
    return %arg0, %c0_i32 : i32, i32
  }
  func.func @transform_1(%arg0: i32) -> (i32, i32) {
    %c0_i32 = arith.constant 0 : i32
    %c0_i32_0 = arith.constant 0 : i32
    return %arg0, %c0_i32 : i32, i32
  }
  func.func @transform_2(%arg0: i32) -> (i32, i32) {
    %c0_i32 = arith.constant 0 : i32
    %c0_i32_0 = arith.constant 0 : i32
    %c0_i32_1 = arith.constant 0 : i32
    return %c0_i32, %c0_i32_0 : i32, i32
  }
  func.func @transform_3(%arg0: i32) -> (i32, i32) {
    %c0_i32 = arith.constant 0 : i32
    %c0_i32_0 = arith.constant 0 : i32
    %c0_i32_1 = arith.constant 0 : i32
    return %c0_i32, %c0_i32_0 : i32, i32
  }
  func.func @transform_4(%arg0: i32) -> (i32, i32) {
    %c0_i32 = arith.constant 0 : i32
    %c0_i32_0 = arith.constant 0 : i32
    %c0_i32_1 = arith.constant 0 : i32
    return %c0_i32, %c0_i32_0 : i32, i32
  }
  func.func @transform_5(%arg0: i32) -> (i32, i32) {
    %c0_i32 = arith.constant 0 : i32
    %c0_i32_0 = arith.constant 0 : i32
    %c0_i32_1 = arith.constant 0 : i32
    return %c0_i32, %c0_i32_0 : i32, i32
  }
  func.func @transform_6(%arg0: i32) -> (i32, i32) {
    %c0_i32 = arith.constant 0 : i32
    %c0_i32_0 = arith.constant 0 : i32
    %c0_i32_1 = arith.constant 0 : i32
    return %c0_i32, %c0_i32_0 : i32, i32
  }
  func.func @transform_7(%arg0: i32) -> (i32, i32) {
    %c0_i32 = arith.constant 0 : i32
    %c0_i32_0 = arith.constant 0 : i32
    %c0_i32_1 = arith.constant 0 : i32
    return %c0_i32, %c0_i32_0 : i32, i32
  }
  func.func @transform_8(%arg0: i32) -> (i32, i32) {
    %c0_i32 = arith.constant 0 : i32
    %c0_i32_0 = arith.constant 0 : i32
    %c0_i32_1 = arith.constant 0 : i32
    return %c0_i32, %c0_i32_0 : i32, i32
  }
  func.func @transform_9(%arg0: i32) -> (i32, i32) {
    %c0_i32 = arith.constant 0 : i32
    %c0_i32_0 = arith.constant 0 : i32
    %c0_i32_1 = arith.constant 0 : i32
    return %c0_i32, %c0_i32_0 : i32, i32
  }
  func.func @transform_10(%arg0: i32) -> (i32, i32) {
    %c0_i32 = arith.constant 0 : i32
    %c0_i32_0 = arith.constant 0 : i32
    %c0_i32_1 = arith.constant 0 : i32
    return %c0_i32, %c0_i32_0 : i32, i32
  }
  func.func @transform_11(%arg0: i32) -> (i32, i32) {
    %c0_i32 = arith.constant 0 : i32
    %c0_i32_0 = arith.constant 0 : i32
    %c0_i32_1 = arith.constant 0 : i32
    return %c0_i32, %c0_i32_0 : i32, i32
  }
  func.func @transform_12(%arg0: i32) -> (i32, i32) {
    %c0_i32 = arith.constant 0 : i32
    %c0_i32_0 = arith.constant 0 : i32
    %c0_i32_1 = arith.constant 0 : i32
    return %c0_i32, %c0_i32_0 : i32, i32
  }
  func.func @transform_13(%arg0: i32) -> (i32, i32) {
    %c0_i32 = arith.constant 0 : i32
    %c0_i32_0 = arith.constant 0 : i32
    %c0_i32_1 = arith.constant 0 : i32
    return %c0_i32, %c0_i32_0 : i32, i32
  }
  func.func @transform_14(%arg0: i32) -> (i32, i32) {
    %c0_i32 = arith.constant 0 : i32
    %c0_i32_0 = arith.constant 0 : i32
    %c0_i32_1 = arith.constant 0 : i32
    return %c0_i32, %c0_i32_0 : i32, i32
  }
  func.func @transform_15(%arg0: i32) -> (i32, i32) {
    %c0_i32 = arith.constant 0 : i32
    %c0_i32_0 = arith.constant 0 : i32
    %c0_i32_1 = arith.constant 0 : i32
    return %c0_i32, %c0_i32_0 : i32, i32
  }
  func.func @transform_16(%arg0: i32) -> (i32, i32) {
    %c0_i32 = arith.constant 0 : i32
    %c0_i32_0 = arith.constant 0 : i32
    return %arg0, %c0_i32 : i32, i32
  }
}

</mosaic_0001>

<llo_original>
// kernel: tpu_custom_call.1
$region0: #{tpu_custom_call.1}
  #allocation0 [shape = 'u32[]', space=smem, size = 0x4, offset = 0x4, fixed_abs, tag = 'smem constant byte address 0x4 - core index']
  #allocation1 [shape = 'u32[144,128]{1,0:T(1,128)}', space=vmem, size = 0x12000, scoped, tag = 'internal scratch']
  #allocation2 [shape = 'f32[1,1]{1,0:T(1,128)S(1)}', space=vmem, size = 0x200, scoped, tag = 'scoped memory for tpu_custom_call.1']
  #allocation3 [shape = 'f32[1,1]{1,0:T(1,128)S(1)}', space=vmem, size = 0x200, scoped, tag = 'scoped memory for tpu_custom_call.1']
  %s0 = inlined_call_operand.hbm [shape: f32[8,12], index: 0, kind: input, shape index: {}]
  %s1 = inlined_call_operand.vmem [shape: f32[8,4], index: 1, kind: input, shape index: {}]
  %s2 = inlined_call_operand.vmem [shape: f32[12,32], index: 2, kind: input, shape index: {}]
  %s3 = inlined_call_operand.hbm [shape: f32[4,32], index: 3, kind: input, shape index: {}]
  %s4 = inlined_call_operand.hbm [shape: f32[1,32], index: 4, kind: input, shape index: {}]
  %s5 = inlined_call_operand.vmem [shape: f32[32,32], index: 5, kind: input, shape index: {}]
  %s6 = inlined_call_operand.hbm [shape: f32[1,32], index: 6, kind: input, shape index: {}]
  %s7 = inlined_call_operand.vmem [shape: f32[32,1], index: 7, kind: input, shape index: {}]
  %s8 = inlined_call_operand.<no memory space> [shape: f32[1,1], index: 8, kind: input, shape index: {}]
  %s9 = inlined_call_operand.vmem [shape: f32[12,32], index: 9, kind: input, shape index: {}]
  %s10 = inlined_call_operand.hbm [shape: f32[4,32], index: 10, kind: input, shape index: {}]
  %s11 = inlined_call_operand.vmem [shape: f32[1,32], index: 11, kind: input, shape index: {}]
  %s12 = inlined_call_operand.vmem [shape: f32[32,32], index: 12, kind: input, shape index: {}]
  %s13 = inlined_call_operand.vmem [shape: f32[1,32], index: 13, kind: input, shape index: {}]
  %s14 = inlined_call_operand.vmem [shape: f32[32,1], index: 14, kind: input, shape index: {}]
  %s15 = inlined_call_operand.<no memory space> [shape: f32[1,1], index: 15, kind: input, shape index: {}]
  %s16 = inlined_call_operand.vmem [shape: f32[8,2], index: 16, kind: output, shape index: {}]
  %s17 = sld [smem:[#allocation0]]
  $region94: #{tpu_custom_call.1} parent=0
    _
  %s19 = ssub.s32 1, %s17
  %s20 = scalar_select 0, %s19, %s17
  %v21 = vstv %s8
  %22 = vst [vmem:[#allocation2] sm:$0x1] %v21
  %v23 = vstv %s15
  %24 = vst [vmem:[#allocation3] sm:$0x1] %v23
  $region1: #{tpu_custom_call.1} parent=0
    #allocation4 [shape = 'u8[4096]{0}', space=vmem, size = 0x1000, scoped, tag = 'input window, operand 0, single buffered']
    #allocation5 [shape = 's32[1]{0}', space=sflag, size = 0x4, scoped, tag = 'scoped memory for tpu_custom_call.1']
    #allocation6 [shape = 'u8[2048]{0}', space=vmem, size = 0x800, scoped, tag = 'input window, operand 3, single buffered']
    #allocation7 [shape = 's32[1]{0}', space=sflag, size = 0x4, scoped, tag = 'scoped memory for tpu_custom_call.1']
    #allocation8 [shape = 'u8[512]{0}', space=vmem, size = 0x400, scoped, tag = 'input window, operand 4, single buffered']
    #allocation9 [shape = 'u8[512]{0}', space=vmem, size = 0x400, scoped, tag = 'input window, operand 6, single buffered']
    #allocation10 [shape = 's32[1]{0}', space=sflag, size = 0x4, scoped, tag = 'scoped memory for tpu_custom_call.1']
    #allocation11 [shape = 'u8[2048]{0}', space=vmem, size = 0x800, scoped, tag = 'input window, operand 10, single buffered']
    %25 = vsyncpa [#allocation5], 0
    %26 = vsyncpa [#allocation7], 0
    %27 = vsyncpa [#allocation10], 0
    // Predicated region
    $region2: #{tpu_custom_call.1} parent=1 // pred_check
      _
    $region3: #{tpu_custom_call.1} parent=1 // pred_check_branch
      %29 = sbr.rel (0) target = $region5
    $region4: #{tpu_custom_call.1} parent=1 // pred_region
      %s31 = ssub.s32 128, 128
      %32 = vsyncadd [#allocation5], %s31
      %s34 = sshll.u32 [#allocation4], 4
      %s35 = int_to_ptr.vmem [resolvable:$true] %s34
      %37 = dma.hbm_to_vmem [thread:$0]  %s0, 128, %s35, [#allocation5]
    $region5: #{tpu_custom_call.1} parent=1 // pred_fallthru
      _
    // Predicated region
    $region6: #{tpu_custom_call.1} parent=1 // pred_check
      _
    $region7: #{tpu_custom_call.1} parent=1 // pred_check_branch
      %39 = sbr.rel (0) target = $region9
    $region8: #{tpu_custom_call.1} parent=1 // pred_region
      _
    $region9: #{tpu_custom_call.1} parent=1 // pred_fallthru
      _
    // Predicated region
    $region10: #{tpu_custom_call.1} parent=1 // pred_check
      _
    $region11: #{tpu_custom_call.1} parent=1 // pred_check_branch
      %41 = sbr.rel (0) target = $region13
    $region12: #{tpu_custom_call.1} parent=1 // pred_region
      _
    $region13: #{tpu_custom_call.1} parent=1 // pred_fallthru
      _
    // Predicated region
    $region14: #{tpu_custom_call.1} parent=1 // pred_check
      _
    $region15: #{tpu_custom_call.1} parent=1 // pred_check_branch
      %43 = sbr.rel (0) target = $region17
    $region16: #{tpu_custom_call.1} parent=1 // pred_region
      %s45 = ssub.s32 64, 64
      %46 = vsyncadd [#allocation7], %s45
      %s48 = sshll.u32 [#allocation6], 4
      %s49 = int_to_ptr.vmem [resolvable:$true] %s48
      %51 = dma.hbm_to_vmem [thread:$0]  %s3, 64, %s49, [#allocation7]
    $region17: #{tpu_custom_call.1} parent=1 // pred_fallthru
      _
    // Predicated region
    $region18: #{tpu_custom_call.1} parent=1 // pred_check
      _
    $region19: #{tpu_custom_call.1} parent=1 // pred_check_branch
      %53 = sbr.rel (0) target = $region21
    $region20: #{tpu_custom_call.1} parent=1 // pred_region
      %s55 = ssub.s32 16, 16
      %56 = vsyncadd [#allocation7], %s55
      %s58 = sshll.u32 [#allocation8], 4
      %s59 = int_to_ptr.vmem [resolvable:$true] %s58
      %61 = dma.hbm_to_vmem [thread:$0]  %s4, 16, %s59, [#allocation7]
    $region21: #{tpu_custom_call.1} parent=1 // pred_fallthru
      _
    // Predicated region
    $region22: #{tpu_custom_call.1} parent=1 // pred_check
      _
    $region23: #{tpu_custom_call.1} parent=1 // pred_check_branch
      %63 = sbr.rel (0) target = $region25
    $region24: #{tpu_custom_call.1} parent=1 // pred_region
      _
    $region25: #{tpu_custom_call.1} parent=1 // pred_fallthru
      _
    // Predicated region
    $region26: #{tpu_custom_call.1} parent=1 // pred_check
      _
    $region27: #{tpu_custom_call.1} parent=1 // pred_check_branch
      %65 = sbr.rel (0) target = $region29
    $region28: #{tpu_custom_call.1} parent=1 // pred_region
      %s67 = ssub.s32 16, 16
      %68 = vsyncadd [#allocation10], %s67
      %s70 = sshll.u32 [#allocation9], 4
      %s71 = int_to_ptr.vmem [resolvable:$true] %s70
      %73 = dma.hbm_to_vmem [thread:$0]  %s6, 16, %s71, [#allocation10]
    $region29: #{tpu_custom_call.1} parent=1 // pred_fallthru
      _
    // Predicated region
    $region30: #{tpu_custom_call.1} parent=1 // pred_check
      _
    $region31: #{tpu_custom_call.1} parent=1 // pred_check_branch
      %75 = sbr.rel (0) target = $region33
    $region32: #{tpu_custom_call.1} parent=1 // pred_region
      _
    $region33: #{tpu_custom_call.1} parent=1 // pred_fallthru
      _
    // Predicated region
    $region34: #{tpu_custom_call.1} parent=1 // pred_check
      _
    $region35: #{tpu_custom_call.1} parent=1 // pred_check_branch
      %77 = sbr.rel (0) target = $region37
    $region36: #{tpu_custom_call.1} parent=1 // pred_region
      _
    $region37: #{tpu_custom_call.1} parent=1 // pred_fallthru
      _
    // Predicated region
    $region38: #{tpu_custom_call.1} parent=1 // pred_check
      _
    $region39: #{tpu_custom_call.1} parent=1 // pred_check_branch
      %79 = sbr.rel (0) target = $region41
    $region40: #{tpu_custom_call.1} parent=1 // pred_region
      _
    $region41: #{tpu_custom_call.1} parent=1 // pred_fallthru
      _
    // Predicated region
    $region42: #{tpu_custom_call.1} parent=1 // pred_check
      _
    $region43: #{tpu_custom_call.1} parent=1 // pred_check_branch
      %81 = sbr.rel (0) target = $region45
    $region44: #{tpu_custom_call.1} parent=1 // pred_region
      %s83 = ssub.s32 64, 64
      %84 = vsyncadd [#allocation10], %s83
      %s86 = sshll.u32 [#allocation11], 4
      %s87 = int_to_ptr.vmem [resolvable:$true] %s86
      %89 = dma.hbm_to_vmem [thread:$0]  %s10, 64, %s87, [#allocation10]
    $region45: #{tpu_custom_call.1} parent=1 // pred_fallthru
      _
    // Predicated region
    $region46: #{tpu_custom_call.1} parent=1 // pred_check
      _
    $region47: #{tpu_custom_call.1} parent=1 // pred_check_branch
      %91 = sbr.rel (0) target = $region49
    $region48: #{tpu_custom_call.1} parent=1 // pred_region
      _
    $region49: #{tpu_custom_call.1} parent=1 // pred_fallthru
      _
    // Predicated region
    $region50: #{tpu_custom_call.1} parent=1 // pred_check
      _
    $region51: #{tpu_custom_call.1} parent=1 // pred_check_branch
      %93 = sbr.rel (0) target = $region53
    $region52: #{tpu_custom_call.1} parent=1 // pred_region
      _
    $region53: #{tpu_custom_call.1} parent=1 // pred_fallthru
      _
    // Predicated region
    $region54: #{tpu_custom_call.1} parent=1 // pred_check
      _
    $region55: #{tpu_custom_call.1} parent=1 // pred_check_branch
      %95 = sbr.rel (0) target = $region57
    $region56: #{tpu_custom_call.1} parent=1 // pred_region
      _
    $region57: #{tpu_custom_call.1} parent=1 // pred_fallthru
      _
    // Predicated region
    $region58: #{tpu_custom_call.1} parent=1 // pred_check
      _
    $region59: #{tpu_custom_call.1} parent=1 // pred_check_branch
      %97 = sbr.rel (0) target = $region61
    $region60: #{tpu_custom_call.1} parent=1 // pred_region
      _
    $region61: #{tpu_custom_call.1} parent=1 // pred_fallthru
      _
    // Predicated region
    $region62: #{tpu_custom_call.1} parent=1 // pred_check
      _
    $region63: #{tpu_custom_call.1} parent=1 // pred_check_branch
      %99 = sbr.rel (0) target = $region65
    $region64: #{tpu_custom_call.1} parent=1 // pred_region
      _
    $region65: #{tpu_custom_call.1} parent=1 // pred_fallthru
      _
    // Predicated region
    $region66: #{tpu_custom_call.1} parent=1 // pred_check
      _
    $region67: #{tpu_custom_call.1} parent=1 // pred_check_branch
      %101 = sbr.rel (0) target = $region69
    $region68: #{tpu_custom_call.1} parent=1 // pred_region
      %102 = dma.done [#allocation5], 128
    $region69: #{tpu_custom_call.1} parent=1 // pred_fallthru
      _
    // Predicated region
    $region70: #{tpu_custom_call.1} parent=1 // pred_check
      _
    $region71: #{tpu_custom_call.1} parent=1 // pred_check_branch
      %104 = sbr.rel (0) target = $region73
    $region72: #{tpu_custom_call.1} parent=1 // pred_region
      %105 = dma.done [#allocation7], 64
    $region73: #{tpu_custom_call.1} parent=1 // pred_fallthru
      _
    // Predicated region
    $region74: #{tpu_custom_call.1} parent=1 // pred_check
      _
    $region75: #{tpu_custom_call.1} parent=1 // pred_check_branch
      %107 = sbr.rel (0) target = $region77
    $region76: #{tpu_custom_call.1} parent=1 // pred_region
      %108 = dma.done [#allocation7], 16
    $region77: #{tpu_custom_call.1} parent=1 // pred_fallthru
      _
    // Predicated region
    $region78: #{tpu_custom_call.1} parent=1 // pred_check
      _
    $region79: #{tpu_custom_call.1} parent=1 // pred_check_branch
      %110 = sbr.rel (0) target = $region81
    $region80: #{tpu_custom_call.1} parent=1 // pred_region
      %111 = dma.done [#allocation10], 16
    $region81: #{tpu_custom_call.1} parent=1 // pred_fallthru
      _
    // Predicated region
    $region82: #{tpu_custom_call.1} parent=1 // pred_check
      _
    $region83: #{tpu_custom_call.1} parent=1 // pred_check_branch
      %113 = sbr.rel (0) target = $region85
    $region84: #{tpu_custom_call.1} parent=1 // pred_region
      %114 = dma.done [#allocation10], 64
    $region85: #{tpu_custom_call.1} parent=1 // pred_fallthru
      _
    %v115 = vld [vmem:[#allocation4] sm:$0xff]
    %v116 = vld [vmem:[%s1] sm:$0xff]
    %v117 = vld [vmem:[%s2] sm:$0xff]
    %v118 = vld [vmem:[%s2 + $0x8] sm:$0xf]
    %v119 = vld [vmem:[#allocation6] sm:$0xf]
    %vm120 = vcmask 31744
    %v122 = vsel %vm120, %v116, 0
    %vm124 = vcmask 1043456
    %v126 = vsel %vm124, %v119, 0
    %128 = vmatprep.subr.mxu0 0.0
    %129 = vmatpush1.msra.mxu0 0.0
    %130 = vmatprep.subr.mxu0 0.0
    %131 = vmatpush1.msra.mxu0 0.0
    %132 = vmatprep.subr.mxu0 0.0
    %133 = vmatpush1.msra.mxu0 0.0
    %134 = vmatprep.subr.mxu0 0.0
    %135 = vmatpush1.msra.mxu0 0.0
    %136 = vmatprep.subr.mxu0 0.0
    %137 = vmatpush1.msra.mxu0 0.0
    %138 = vmatprep.subr.mxu0 0.0
    %139 = vmatpush1.msra.mxu0 0.0
    %140 = vmatprep.subr.mxu0 0.0
    %141 = vmatpush1.msra.mxu0 0.0
    %142 = vmatprep.subr.mxu0 0.0
    %143 = vmatpush1.msra.mxu0 0.0
    %144 = vmatprep.subr.mxu0 0.0
    %145 = vmatpush1.msra.mxu0 0.0
    %146 = vmatprep.subr.mxu0 0.0
    %147 = vmatpush1.msra.mxu0 0.0
    %148 = vmatprep.subr.mxu0 0.0
    %149 = vmatpush1.msra.mxu0 0.0
    %150 = vmatprep.subr.mxu0 0.0
    %151 = vmatpush1.msra.mxu0 0.0
    %152 = vmatprep.subr.mxu0 0.0
    %153 = vmatpush1.msra.mxu0 0.0
    %154 = vmatprep.subr.mxu0 0.0
    %155 = vmatpush1.msra.mxu0 0.0
    %156 = vmatprep.subr.mxu0 0.0
    %157 = vmatpush1.msra.mxu0 0.0
    %158 = vmatprep.subr.mxu0 0.0
    %159 = vmatpush1.msra.mxu0 %v126
    %160 = vmatprep.subr.mxu0 0.0
    %161 = vmatpush2.msra.mxu0 0.0
    %162 = vmatprep.subr.mxu0 0.0
    %163 = vmatpush2.msra.mxu0 0.0
    %164 = vmatprep.subr.mxu0 0.0
    %165 = vmatpush2.msra.mxu0 0.0
    %166 = vmatprep.subr.mxu0 0.0
    %167 = vmatpush2.msra.mxu0 0.0
    %168 = vmatprep.subr.mxu0 0.0
    %169 = vmatpush2.msra.mxu0 0.0
    %170 = vmatprep.subr.mxu0 0.0
    %171 = vmatpush2.msra.mxu0 0.0
    %172 = vmatprep.subr.mxu0 0.0
    %173 = vmatpush2.msra.mxu0 0.0
    %174 = vmatprep.subr.mxu0 0.0
    %175 = vmatpush2.msra.mxu0 0.0
    %176 = vmatprep.subr.mxu0 0.0
    %177 = vmatpush2.msra.mxu0 0.0
    %178 = vmatprep.subr.mxu0 0.0
    %179 = vmatpush2.msra.mxu0 0.0
    %180 = vmatprep.subr.mxu0 0.0
    %181 = vmatpush2.msra.mxu0 0.0
    %182 = vmatprep.subr.mxu0 0.0
    %183 = vmatpush2.msra.mxu0 0.0
    %184 = vmatprep.subr.mxu0 0.0
    %185 = vmatpush2.msra.mxu0 0.0
    %186 = vmatprep.subr.mxu0 0.0
    %187 = vmatpush2.msra.mxu0 0.0
    %188 = vmatprep.subr.mxu0 0.0
    %189 = vmatpush2.msra.mxu0 0.0
    %190 = vmatprep.subr.mxu0 0.0
    %191 = vmatpush2.msra.mxu0 0.0
    %192 = vmatprep.mubr.f32.mxu0 0.0
    %193 = vmatmul.mubr.f32.gmra.mxu0 %v122
    %v194 = vpop.f32.mrf.mxu0
    %v195 = vadd.f32 0.0, %v194
    %v196 = vpop.f32.mrf.mxu0
    %197 = vdwg.mxu0
    %vm198 = vcmask 97280
    %v200 = vsel %vm198, %v115, 0
    %v203 = vsel %vm124, %v118, 0
    %205 = vmatprep.subr.mxu0 0.0
    %206 = vmatpush1.msra.mxu0 0.0
    %207 = vmatprep.subr.mxu0 0.0
    %208 = vmatpush1.msra.mxu0 0.0
    %209 = vmatprep.subr.mxu0 0.0
    %210 = vmatpush1.msra.mxu0 0.0
    %211 = vmatprep.subr.mxu0 0.0
    %212 = vmatpush1.msra.mxu0 0.0
    %213 = vmatprep.subr.mxu0 0.0
    %214 = vmatpush1.msra.mxu0 0.0
    %215 = vmatprep.subr.mxu0 0.0
    %216 = vmatpush1.msra.mxu0 0.0
    %217 = vmatprep.subr.mxu0 0.0
    %218 = vmatpush1.msra.mxu0 0.0
    %219 = vmatprep.subr.mxu0 0.0
    %220 = vmatpush1.msra.mxu0 0.0
    %221 = vmatprep.subr.mxu0 0.0
    %222 = vmatpush1.msra.mxu0 0.0
    %223 = vmatprep.subr.mxu0 0.0
    %224 = vmatpush1.msra.mxu0 0.0
    %225 = vmatprep.subr.mxu0 0.0
    %226 = vmatpush1.msra.mxu0 0.0
    %227 = vmatprep.subr.mxu0 0.0
    %228 = vmatpush1.msra.mxu0 0.0
    %229 = vmatprep.subr.mxu0 0.0
    %230 = vmatpush1.msra.mxu0 0.0
    %231 = vmatprep.subr.mxu0 0.0
    %232 = vmatpush1.msra.mxu0 0.0
    %233 = vmatprep.subr.mxu0 0.0
    %234 = vmatpush1.msra.mxu0 %v203
    %235 = vmatprep.subr.mxu0 0.0
    %236 = vmatpush1.msra.mxu0 %v117
    %237 = vmatprep.subr.mxu0 0.0
    %238 = vmatpush2.msra.mxu0 0.0
    %239 = vmatprep.subr.mxu0 0.0
    %240 = vmatpush2.msra.mxu0 0.0
    %241 = vmatprep.subr.mxu0 0.0
    %242 = vmatpush2.msra.mxu0 0.0
    %243 = vmatprep.subr.mxu0 0.0
    %244 = vmatpush2.msra.mxu0 0.0
    %245 = vmatprep.subr.mxu0 0.0
    %246 = vmatpush2.msra.mxu0 0.0
    %247 = vmatprep.subr.mxu0 0.0
    %248 = vmatpush2.msra.mxu0 0.0
    %249 = vmatprep.subr.mxu0 0.0
    %250 = vmatpush2.msra.mxu0 0.0
    %251 = vmatprep.subr.mxu0 0.0
    %252 = vmatpush2.msra.mxu0 0.0
    %253 = vmatprep.subr.mxu0 0.0
    %254 = vmatpush2.msra.mxu0 0.0
    %255 = vmatprep.subr.mxu0 0.0
    %256 = vmatpush2.msra.mxu0 0.0
    %257 = vmatprep.subr.mxu0 0.0
    %258 = vmatpush2.msra.mxu0 0.0
    %259 = vmatprep.subr.mxu0 0.0
    %260 = vmatpush2.msra.mxu0 0.0
    %261 = vmatprep.subr.mxu0 0.0
    %262 = vmatpush2.msra.mxu0 0.0
    %263 = vmatprep.subr.mxu0 0.0
    %264 = vmatpush2.msra.mxu0 0.0
    %265 = vmatprep.subr.mxu0 0.0
    %266 = vmatpush2.msra.mxu0 0.0
    %267 = vmatprep.subr.mxu0 0.0
    %268 = vmatpush2.msra.mxu0 0.0
    %269 = vmatprep.mubr.f32.mxu0 0.0
    %270 = vmatmul.mubr.f32.gmra.mxu0 %v200
    %v271 = vpop.f32.mrf.mxu0
    %v272 = vadd.f32 %v195, %v271
    %v273 = vpop.f32.mrf.mxu0
    %274 = vdwg.mxu0
    %v275 = vld [vmem:[#allocation8] sm:$0x1]
    %v277 = vlaneseq
    %v278 = vshrl.u32 %v277, 7
    %v279 = vsub.s32 0, %v278
    %v280 = vrot.slane %v275, %v279
    %v282 = vadd.f32 %v272, %v280
    %v283 = vmax.f32 %v282, 0.0
    %v284 = vld [vmem:[%s5] sm:$0xff]
    %v285 = vld [vmem:[%s5 + $0x8] sm:$0xff]
    %v286 = vld [vmem:[%s5 + $0x10] sm:$0xff]
    %v287 = vld [vmem:[%s5 + $0x18] sm:$0xff]
    %v288 = vld [vmem:[#allocation9] sm:$0x1]
    %v290 = vlaneseq
    %v291 = vshrl.u32 %v290, 7
    %v292 = vsub.s32 0, %v291
    %v293 = vrot.slane %v288, %v292
    %vm295 = vcmask 261120
    %v297 = vsel %vm295, %v283, 0
    %299 = vmatprep.subr.mxu0 0.0
    %300 = vmatpush1.msra.mxu0 0.0
    %301 = vmatprep.subr.mxu0 0.0
    %302 = vmatpush1.msra.mxu0 0.0
    %303 = vmatprep.subr.mxu0 0.0
    %304 = vmatpush1.msra.mxu0 0.0
    %305 = vmatprep.subr.mxu0 0.0
    %306 = vmatpush1.msra.mxu0 0.0
    %307 = vmatprep.subr.mxu0 0.0
    %308 = vmatpush1.msra.mxu0 0.0
    %309 = vmatprep.subr.mxu0 0.0
    %310 = vmatpush1.msra.mxu0 0.0
    %311 = vmatprep.subr.mxu0 0.0
    %312 = vmatpush1.msra.mxu0 0.0
    %313 = vmatprep.subr.mxu0 0.0
    %314 = vmatpush1.msra.mxu0 0.0
    %315 = vmatprep.subr.mxu0 0.0
    %316 = vmatpush1.msra.mxu0 0.0
    %317 = vmatprep.subr.mxu0 0.0
    %318 = vmatpush1.msra.mxu0 0.0
    %319 = vmatprep.subr.mxu0 0.0
    %320 = vmatpush1.msra.mxu0 0.0
    %321 = vmatprep.subr.mxu0 0.0
    %322 = vmatpush1.msra.mxu0 0.0
    %323 = vmatprep.subr.mxu0 0.0
    %324 = vmatpush1.msra.mxu0 %v287
    %325 = vmatprep.subr.mxu0 0.0
    %326 = vmatpush1.msra.mxu0 %v286
    %327 = vmatprep.subr.mxu0 0.0
    %328 = vmatpush1.msra.mxu0 %v285
    %329 = vmatprep.subr.mxu0 0.0
    %330 = vmatpush1.msra.mxu0 %v284
    %331 = vmatprep.subr.mxu0 0.0
    %332 = vmatpush2.msra.mxu0 0.0
    %333 = vmatprep.subr.mxu0 0.0
    %334 = vmatpush2.msra.mxu0 0.0
    %335 = vmatprep.subr.mxu0 0.0
    %336 = vmatpush2.msra.mxu0 0.0
    %337 = vmatprep.subr.mxu0 0.0
    %338 = vmatpush2.msra.mxu0 0.0
    %339 = vmatprep.subr.mxu0 0.0
    %340 = vmatpush2.msra.mxu0 0.0
    %341 = vmatprep.subr.mxu0 0.0
    %342 = vmatpush2.msra.mxu0 0.0
    %343 = vmatprep.subr.mxu0 0.0
    %344 = vmatpush2.msra.mxu0 0.0
    %345 = vmatprep.subr.mxu0 0.0
    %346 = vmatpush2.msra.mxu0 0.0
    %347 = vmatprep.subr.mxu0 0.0
    %348 = vmatpush2.msra.mxu0 0.0
    %349 = vmatprep.subr.mxu0 0.0
    %350 = vmatpush2.msra.mxu0 0.0
    %351 = vmatprep.subr.mxu0 0.0
    %352 = vmatpush2.msra.mxu0 0.0
    %353 = vmatprep.subr.mxu0 0.0
    %354 = vmatpush2.msra.mxu0 0.0
    %355 = vmatprep.subr.mxu0 0.0
    %356 = vmatpush2.msra.mxu0 0.0
    %357 = vmatprep.subr.mxu0 0.0
    %358 = vmatpush2.msra.mxu0 0.0
    %359 = vmatprep.subr.mxu0 0.0
    %360 = vmatpush2.msra.mxu0 0.0
    %361 = vmatprep.subr.mxu0 0.0
    %362 = vmatpush2.msra.mxu0 0.0
    %363 = vmatprep.mubr.f32.mxu0 0.0
    %364 = vmatmul.mubr.f32.gmra.mxu0 %v297
    %v365 = vpop.f32.mrf.mxu0
    %v366 = vadd.f32 %v293, %v365
    %v367 = vpop.f32.mrf.mxu0
    %368 = vdwg.mxu0
    %v369 = vmax.f32 %v366, 0.0
    %v370 = vld [vmem:[%s7] sm:$0xff]
    %v371 = vld [vmem:[%s7 + $0x8] sm:$0xff]
    %v372 = vld [vmem:[%s7 + $0x10] sm:$0xff]
    %v373 = vld [vmem:[%s7 + $0x18] sm:$0xff]
    %v374 = vld [vmem:[#allocation2] sm:$0x1]
    %v376 = vlaneseq
    %v377 = vshrl.u32 %v376, 7
    %v378 = vsub.s32 0, %v377
    %v379 = vrot.slane %v374, %v378
    %v382 = vsel %vm295, %v369, 0
    %384 = vmatprep.subr.mxu0 0.0
    %385 = vmatpush1.msra.mxu0 0.0
    %386 = vmatprep.subr.mxu0 0.0
    %387 = vmatpush1.msra.mxu0 0.0
    %388 = vmatprep.subr.mxu0 0.0
    %389 = vmatpush1.msra.mxu0 0.0
    %390 = vmatprep.subr.mxu0 0.0
    %391 = vmatpush1.msra.mxu0 0.0
    %392 = vmatprep.subr.mxu0 0.0
    %393 = vmatpush1.msra.mxu0 0.0
    %394 = vmatprep.subr.mxu0 0.0
    %395 = vmatpush1.msra.mxu0 0.0
    %396 = vmatprep.subr.mxu0 0.0
    %397 = vmatpush1.msra.mxu0 0.0
    %398 = vmatprep.subr.mxu0 0.0
    %399 = vmatpush1.msra.mxu0 0.0
    %400 = vmatprep.subr.mxu0 0.0
    %401 = vmatpush1.msra.mxu0 0.0
    %402 = vmatprep.subr.mxu0 0.0
    %403 = vmatpush1.msra.mxu0 0.0
    %404 = vmatprep.subr.mxu0 0.0
    %405 = vmatpush1.msra.mxu0 0.0
    %406 = vmatprep.subr.mxu0 0.0
    %407 = vmatpush1.msra.mxu0 0.0
    %408 = vmatprep.subr.mxu0 0.0
    %409 = vmatpush1.msra.mxu0 %v373
    %410 = vmatprep.subr.mxu0 0.0
    %411 = vmatpush1.msra.mxu0 %v372
    %412 = vmatprep.subr.mxu0 0.0
    %413 = vmatpush1.msra.mxu0 %v371
    %414 = vmatprep.subr.mxu0 0.0
    %415 = vmatpush1.msra.mxu0 %v370
    %416 = vmatprep.subr.mxu0 0.0
    %417 = vmatpush2.msra.mxu0 0.0
    %418 = vmatprep.subr.mxu0 0.0
    %419 = vmatpush2.msra.mxu0 0.0
    %420 = vmatprep.subr.mxu0 0.0
    %421 = vmatpush2.msra.mxu0 0.0
    %422 = vmatprep.subr.mxu0 0.0
    %423 = vmatpush2.msra.mxu0 0.0
    %424 = vmatprep.subr.mxu0 0.0
    %425 = vmatpush2.msra.mxu0 0.0
    %426 = vmatprep.subr.mxu0 0.0
    %427 = vmatpush2.msra.mxu0 0.0
    %428 = vmatprep.subr.mxu0 0.0
    %429 = vmatpush2.msra.mxu0 0.0
    %430 = vmatprep.subr.mxu0 0.0
    %431 = vmatpush2.msra.mxu0 0.0
    %432 = vmatprep.subr.mxu0 0.0
    %433 = vmatpush2.msra.mxu0 0.0
    %434 = vmatprep.subr.mxu0 0.0
    %435 = vmatpush2.msra.mxu0 0.0
    %436 = vmatprep.subr.mxu0 0.0
    %437 = vmatpush2.msra.mxu0 0.0
    %438 = vmatprep.subr.mxu0 0.0
    %439 = vmatpush2.msra.mxu0 0.0
    %440 = vmatprep.subr.mxu0 0.0
    %441 = vmatpush2.msra.mxu0 0.0
    %442 = vmatprep.subr.mxu0 0.0
    %443 = vmatpush2.msra.mxu0 0.0
    %444 = vmatprep.subr.mxu0 0.0
    %445 = vmatpush2.msra.mxu0 0.0
    %446 = vmatprep.subr.mxu0 0.0
    %447 = vmatpush2.msra.mxu0 0.0
    %448 = vmatprep.mubr.f32.mxu0 0.0
    %449 = vmatmul.mubr.f32.gmra.mxu0 %v382
    %v450 = vpop.f32.mrf.mxu0
    %v451 = vadd.f32 %v379, %v450
    %v452 = vpop.f32.mrf.mxu0
    %453 = vdwg.mxu0
    %vm454 = vcmask 7168
    %455 = vst.msk [vmem:[%s16] sm:$0xff] %vm454, %v451
    %v456 = vld [vmem:[%s9] sm:$0xff]
    %v457 = vld [vmem:[%s9 + $0x8] sm:$0xf]
    %v458 = vld [vmem:[#allocation11] sm:$0xf]
    %v460 = vsel %vm124, %v458, 0
    %462 = vmatprep.subr.mxu0 0.0
    %463 = vmatpush1.msra.mxu0 0.0
    %464 = vmatprep.subr.mxu0 0.0
    %465 = vmatpush1.msra.mxu0 0.0
    %466 = vmatprep.subr.mxu0 0.0
    %467 = vmatpush1.msra.mxu0 0.0
    %468 = vmatprep.subr.mxu0 0.0
    %469 = vmatpush1.msra.mxu0 0.0
    %470 = vmatprep.subr.mxu0 0.0
    %471 = vmatpush1.msra.mxu0 0.0
    %472 = vmatprep.subr.mxu0 0.0
    %473 = vmatpush1.msra.mxu0 0.0
    %474 = vmatprep.subr.mxu0 0.0
    %475 = vmatpush1.msra.mxu0 0.0
    %476 = vmatprep.subr.mxu0 0.0
    %477 = vmatpush1.msra.mxu0 0.0
    %478 = vmatprep.subr.mxu0 0.0
    %479 = vmatpush1.msra.mxu0 0.0
    %480 = vmatprep.subr.mxu0 0.0
    %481 = vmatpush1.msra.mxu0 0.0
    %482 = vmatprep.subr.mxu0 0.0
    %483 = vmatpush1.msra.mxu0 0.0
    %484 = vmatprep.subr.mxu0 0.0
    %485 = vmatpush1.msra.mxu0 0.0
    %486 = vmatprep.subr.mxu0 0.0
    %487 = vmatpush1.msra.mxu0 0.0
    %488 = vmatprep.subr.mxu0 0.0
    %489 = vmatpush1.msra.mxu0 0.0
    %490 = vmatprep.subr.mxu0 0.0
    %491 = vmatpush1.msra.mxu0 0.0
    %492 = vmatprep.subr.mxu0 0.0
    %493 = vmatpush1.msra.mxu0 %v460
    %494 = vmatprep.subr.mxu0 0.0
    %495 = vmatpush2.msra.mxu0 0.0
    %496 = vmatprep.subr.mxu0 0.0
    %497 = vmatpush2.msra.mxu0 0.0
    %498 = vmatprep.subr.mxu0 0.0
    %499 = vmatpush2.msra.mxu0 0.0
    %500 = vmatprep.subr.mxu0 0.0
    %501 = vmatpush2.msra.mxu0 0.0
    %502 = vmatprep.subr.mxu0 0.0
    %503 = vmatpush2.msra.mxu0 0.0
    %504 = vmatprep.subr.mxu0 0.0
    %505 = vmatpush2.msra.mxu0 0.0
    %506 = vmatprep.subr.mxu0 0.0
    %507 = vmatpush2.msra.mxu0 0.0
    %508 = vmatprep.subr.mxu0 0.0
    %509 = vmatpush2.msra.mxu0 0.0
    %510 = vmatprep.subr.mxu0 0.0
    %511 = vmatpush2.msra.mxu0 0.0
    %512 = vmatprep.subr.mxu0 0.0
    %513 = vmatpush2.msra.mxu0 0.0
    %514 = vmatprep.subr.mxu0 0.0
    %515 = vmatpush2.msra.mxu0 0.0
    %516 = vmatprep.subr.mxu0 0.0
    %517 = vmatpush2.msra.mxu0 0.0
    %518 = vmatprep.subr.mxu0 0.0
    %519 = vmatpush2.msra.mxu0 0.0
    %520 = vmatprep.subr.mxu0 0.0
    %521 = vmatpush2.msra.mxu0 0.0
    %522 = vmatprep.subr.mxu0 0.0
    %523 = vmatpush2.msra.mxu0 0.0
    %524 = vmatprep.subr.mxu0 0.0
    %525 = vmatpush2.msra.mxu0 0.0
    %526 = vmatprep.mubr.f32.mxu0 0.0
    %527 = vmatmul.mubr.f32.gmra.mxu0 %v122
    %v528 = vpop.f32.mrf.mxu0
    %v529 = vadd.f32 0.0, %v528
    %v530 = vpop.f32.mrf.mxu0
    %531 = vdwg.mxu0
    %v533 = vsel %vm124, %v457, 0
    %535 = vmatprep.subr.mxu0 0.0
    %536 = vmatpush1.msra.mxu0 0.0
    %537 = vmatprep.subr.mxu0 0.0
    %538 = vmatpush1.msra.mxu0 0.0
    %539 = vmatprep.subr.mxu0 0.0
    %540 = vmatpush1.msra.mxu0 0.0
    %541 = vmatprep.subr.mxu0 0.0
    %542 = vmatpush1.msra.mxu0 0.0
    %543 = vmatprep.subr.mxu0 0.0
    %544 = vmatpush1.msra.mxu0 0.0
    %545 = vmatprep.subr.mxu0 0.0
    %546 = vmatpush1.msra.mxu0 0.0
    %547 = vmatprep.subr.mxu0 0.0
    %548 = vmatpush1.msra.mxu0 0.0
    %549 = vmatprep.subr.mxu0 0.0
    %550 = vmatpush1.msra.mxu0 0.0
    %551 = vmatprep.subr.mxu0 0.0
    %552 = vmatpush1.msra.mxu0 0.0
    %553 = vmatprep.subr.mxu0 0.0
    %554 = vmatpush1.msra.mxu0 0.0
    %555 = vmatprep.subr.mxu0 0.0
    %556 = vmatpush1.msra.mxu0 0.0
    %557 = vmatprep.subr.mxu0 0.0
    %558 = vmatpush1.msra.mxu0 0.0
    %559 = vmatprep.subr.mxu0 0.0
    %560 = vmatpush1.msra.mxu0 0.0
    %561 = vmatprep.subr.mxu0 0.0
    %562 = vmatpush1.msra.mxu0 0.0
    %563 = vmatprep.subr.mxu0 0.0
    %564 = vmatpush1.msra.mxu0 %v533
    %565 = vmatprep.subr.mxu0 0.0
    %566 = vmatpush1.msra.mxu0 %v456
    %567 = vmatprep.subr.mxu0 0.0
    %568 = vmatpush2.msra.mxu0 0.0
    %569 = vmatprep.subr.mxu0 0.0
    %570 = vmatpush2.msra.mxu0 0.0
    %571 = vmatprep.subr.mxu0 0.0
    %572 = vmatpush2.msra.mxu0 0.0
    %573 = vmatprep.subr.mxu0 0.0
    %574 = vmatpush2.msra.mxu0 0.0
    %575 = vmatprep.subr.mxu0 0.0
    %576 = vmatpush2.msra.mxu0 0.0
    %577 = vmatprep.subr.mxu0 0.0
    %578 = vmatpush2.msra.mxu0 0.0
    %579 = vmatprep.subr.mxu0 0.0
    %580 = vmatpush2.msra.mxu0 0.0
    %581 = vmatprep.subr.mxu0 0.0
    %582 = vmatpush2.msra.mxu0 0.0
    %583 = vmatprep.subr.mxu0 0.0
    %584 = vmatpush2.msra.mxu0 0.0
    %585 = vmatprep.subr.mxu0 0.0
    %586 = vmatpush2.msra.mxu0 0.0
    %587 = vmatprep.subr.mxu0 0.0
    %588 = vmatpush2.msra.mxu0 0.0
    %589 = vmatprep.subr.mxu0 0.0
    %590 = vmatpush2.msra.mxu0 0.0
    %591 = vmatprep.subr.mxu0 0.0
    %592 = vmatpush2.msra.mxu0 0.0
    %593 = vmatprep.subr.mxu0 0.0
    %594 = vmatpush2.msra.mxu0 0.0
    %595 = vmatprep.subr.mxu0 0.0
    %596 = vmatpush2.msra.mxu0 0.0
    %597 = vmatprep.subr.mxu0 0.0
    %598 = vmatpush2.msra.mxu0 0.0
    %599 = vmatprep.mubr.f32.mxu0 0.0
    %600 = vmatmul.mubr.f32.gmra.mxu0 %v200
    %v601 = vpop.f32.mrf.mxu0
    %v602 = vadd.f32 %v529, %v601
    %v603 = vpop.f32.mrf.mxu0
    %604 = vdwg.mxu0
    %v605 = vld [vmem:[%s11] sm:$0x1]
    %v607 = vlaneseq
    %v608 = vshrl.u32 %v607, 7
    %v609 = vsub.s32 0, %v608
    %v610 = vrot.slane %v605, %v609
    %v612 = vadd.f32 %v602, %v610
    %v613 = vmax.f32 %v612, 0.0
    %v614 = vld [vmem:[%s12] sm:$0xff]
    %v615 = vld [vmem:[%s12 + $0x8] sm:$0xff]
    %v616 = vld [vmem:[%s12 + $0x10] sm:$0xff]
    %v617 = vld [vmem:[%s12 + $0x18] sm:$0xff]
    %v618 = vld [vmem:[%s13] sm:$0x1]
    %v620 = vlaneseq
    %v621 = vshrl.u32 %v620, 7
    %v622 = vsub.s32 0, %v621
    %v623 = vrot.slane %v618, %v622
    %v626 = vsel %vm295, %v613, 0
    %628 = vmatprep.subr.mxu0 0.0
    %629 = vmatpush1.msra.mxu0 0.0
    %630 = vmatprep.subr.mxu0 0.0
    %631 = vmatpush1.msra.mxu0 0.0
    %632 = vmatprep.subr.mxu0 0.0
    %633 = vmatpush1.msra.mxu0 0.0
    %634 = vmatprep.subr.mxu0 0.0
    %635 = vmatpush1.msra.mxu0 0.0
    %636 = vmatprep.subr.mxu0 0.0
    %637 = vmatpush1.msra.mxu0 0.0
    %638 = vmatprep.subr.mxu0 0.0
    %639 = vmatpush1.msra.mxu0 0.0
    %640 = vmatprep.subr.mxu0 0.0
    %641 = vmatpush1.msra.mxu0 0.0
    %642 = vmatprep.subr.mxu0 0.0
    %643 = vmatpush1.msra.mxu0 0.0
    %644 = vmatprep.subr.mxu0 0.0
    %645 = vmatpush1.msra.mxu0 0.0
    %646 = vmatprep.subr.mxu0 0.0
    %647 = vmatpush1.msra.mxu0 0.0
    %648 = vmatprep.subr.mxu0 0.0
    %649 = vmatpush1.msra.mxu0 0.0
    %650 = vmatprep.subr.mxu0 0.0
    %651 = vmatpush1.msra.mxu0 0.0
    %652 = vmatprep.subr.mxu0 0.0
    %653 = vmatpush1.msra.mxu0 %v617
    %654 = vmatprep.subr.mxu0 0.0
    %655 = vmatpush1.msra.mxu0 %v616
    %656 = vmatprep.subr.mxu0 0.0
    %657 = vmatpush1.msra.mxu0 %v615
    %658 = vmatprep.subr.mxu0 0.0
    %659 = vmatpush1.msra.mxu0 %v614
    %660 = vmatprep.subr.mxu0 0.0
    %661 = vmatpush2.msra.mxu0 0.0
    %662 = vmatprep.subr.mxu0 0.0
    %663 = vmatpush2.msra.mxu0 0.0
    %664 = vmatprep.subr.mxu0 0.0
    %665 = vmatpush2.msra.mxu0 0.0
    %666 = vmatprep.subr.mxu0 0.0
    %667 = vmatpush2.msra.mxu0 0.0
    %668 = vmatprep.subr.mxu0 0.0
    %669 = vmatpush2.msra.mxu0 0.0
    %670 = vmatprep.subr.mxu0 0.0
    %671 = vmatpush2.msra.mxu0 0.0
    %672 = vmatprep.subr.mxu0 0.0
    %673 = vmatpush2.msra.mxu0 0.0
    %674 = vmatprep.subr.mxu0 0.0
    %675 = vmatpush2.msra.mxu0 0.0
    %676 = vmatprep.subr.mxu0 0.0
    %677 = vmatpush2.msra.mxu0 0.0
    %678 = vmatprep.subr.mxu0 0.0
    %679 = vmatpush2.msra.mxu0 0.0
    %680 = vmatprep.subr.mxu0 0.0
    %681 = vmatpush2.msra.mxu0 0.0
    %682 = vmatprep.subr.mxu0 0.0
    %683 = vmatpush2.msra.mxu0 0.0
    %684 = vmatprep.subr.mxu0 0.0
    %685 = vmatpush2.msra.mxu0 0.0
    %686 = vmatprep.subr.mxu0 0.0
    %687 = vmatpush2.msra.mxu0 0.0
    %688 = vmatprep.subr.mxu0 0.0
    %689 = vmatpush2.msra.mxu0 0.0
    %690 = vmatprep.subr.mxu0 0.0
    %691 = vmatpush2.msra.mxu0 0.0
    %692 = vmatprep.mubr.f32.mxu0 0.0
    %693 = vmatmul.mubr.f32.gmra.mxu0 %v626
    %v694 = vpop.f32.mrf.mxu0
    %v695 = vadd.f32 %v623, %v694
    %v696 = vpop.f32.mrf.mxu0
    %697 = vdwg.mxu0
    %v698 = vmax.f32 %v695, 0.0
    %v699 = vld [vmem:[%s14] sm:$0xff]
    %v700 = vld [vmem:[%s14 + $0x8] sm:$0xff]
    %v701 = vld [vmem:[%s14 + $0x10] sm:$0xff]
    %v702 = vld [vmem:[%s14 + $0x18] sm:$0xff]
    %v703 = vld [vmem:[#allocation3] sm:$0x1]
    %v705 = vlaneseq
    %v706 = vshrl.u32 %v705, 7
    %v707 = vsub.s32 0, %v706
    %v708 = vrot.slane %v703, %v707
    %v711 = vsel %vm295, %v698, 0
    %713 = vmatprep.subr.mxu0 0.0
    %714 = vmatpush1.msra.mxu0 0.0
    %715 = vmatprep.subr.mxu0 0.0
    %716 = vmatpush1.msra.mxu0 0.0
    %717 = vmatprep.subr.mxu0 0.0
    %718 = vmatpush1.msra.mxu0 0.0
    %719 = vmatprep.subr.mxu0 0.0
    %720 = vmatpush1.msra.mxu0 0.0
    %721 = vmatprep.subr.mxu0 0.0
    %722 = vmatpush1.msra.mxu0 0.0
    %723 = vmatprep.subr.mxu0 0.0
    %724 = vmatpush1.msra.mxu0 0.0
    %725 = vmatprep.subr.mxu0 0.0
    %726 = vmatpush1.msra.mxu0 0.0
    %727 = vmatprep.subr.mxu0 0.0
    %728 = vmatpush1.msra.mxu0 0.0
    %729 = vmatprep.subr.mxu0 0.0
    %730 = vmatpush1.msra.mxu0 0.0
    %731 = vmatprep.subr.mxu0 0.0
    %732 = vmatpush1.msra.mxu0 0.0
    %733 = vmatprep.subr.mxu0 0.0
    %734 = vmatpush1.msra.mxu0 0.0
    %735 = vmatprep.subr.mxu0 0.0
    %736 = vmatpush1.msra.mxu0 0.0
    %737 = vmatprep.subr.mxu0 0.0
    %738 = vmatpush1.msra.mxu0 %v702
    %739 = vmatprep.subr.mxu0 0.0
    %740 = vmatpush1.msra.mxu0 %v701
    %741 = vmatprep.subr.mxu0 0.0
    %742 = vmatpush1.msra.mxu0 %v700
    %743 = vmatprep.subr.mxu0 0.0
    %744 = vmatpush1.msra.mxu0 %v699
    %745 = vmatprep.subr.mxu0 0.0
    %746 = vmatpush2.msra.mxu0 0.0
    %747 = vmatprep.subr.mxu0 0.0
    %748 = vmatpush2.msra.mxu0 0.0
    %749 = vmatprep.subr.mxu0 0.0
    %750 = vmatpush2.msra.mxu0 0.0
    %751 = vmatprep.subr.mxu0 0.0
    %752 = vmatpush2.msra.mxu0 0.0
    %753 = vmatprep.subr.mxu0 0.0
    %754 = vmatpush2.msra.mxu0 0.0
    %755 = vmatprep.subr.mxu0 0.0
    %756 = vmatpush2.msra.mxu0 0.0
    %757 = vmatprep.subr.mxu0 0.0
    %758 = vmatpush2.msra.mxu0 0.0
    %759 = vmatprep.subr.mxu0 0.0
    %760 = vmatpush2.msra.mxu0 0.0
    %761 = vmatprep.subr.mxu0 0.0
    %762 = vmatpush2.msra.mxu0 0.0
    %763 = vmatprep.subr.mxu0 0.0
    %764 = vmatpush2.msra.mxu0 0.0
    %765 = vmatprep.subr.mxu0 0.0
    %766 = vmatpush2.msra.mxu0 0.0
    %767 = vmatprep.subr.mxu0 0.0
    %768 = vmatpush2.msra.mxu0 0.0
    %769 = vmatprep.subr.mxu0 0.0
    %770 = vmatpush2.msra.mxu0 0.0
    %771 = vmatprep.subr.mxu0 0.0
    %772 = vmatpush2.msra.mxu0 0.0
    %773 = vmatprep.subr.mxu0 0.0
    %774 = vmatpush2.msra.mxu0 0.0
    %775 = vmatprep.subr.mxu0 0.0
    %776 = vmatpush2.msra.mxu0 0.0
    %777 = vmatprep.mubr.f32.mxu0 0.0
    %778 = vmatmul.mubr.f32.gmra.mxu0 %v711
    %v779 = vpop.f32.mrf.mxu0
    %v780 = vadd.f32 %v708, %v779
    %v781 = vpop.f32.mrf.mxu0
    %782 = vdwg.mxu0
    %784 = vrot.lane.b32.xlu0 %v780, 1
    %v785 = vpop.permute.xlu0 %784
    %vm787 = vcmask 15368
    %788 = vst.msk [vmem:[%s16] sm:$0xff] %vm787, %v785
    // Predicated region
    $region86: #{tpu_custom_call.1} parent=1 // pred_check
      _
    $region87: #{tpu_custom_call.1} parent=1 // pred_check_branch
      %790 = sbr.rel (0) target = $region89
    $region88: #{tpu_custom_call.1} parent=1 // pred_region
      _
    $region89: #{tpu_custom_call.1} parent=1 // pred_fallthru
      _
    // Predicated region
    $region90: #{tpu_custom_call.1} parent=1 // pred_check
      _
    $region91: #{tpu_custom_call.1} parent=1 // pred_check_branch
      %792 = sbr.rel (0) target = $region93
    $region92: #{tpu_custom_call.1} parent=1 // pred_region
      _
    $region93: #{tpu_custom_call.1} parent=1 // pred_fallthru
      _
    %793 = vsyncpa [#allocation5], 1
    %794 = vsyncpa [#allocation7], 1
    %795 = vsyncpa [#allocation10], 1

</llo_original>
